<compile_context>
chip_gen: v7x
topology: tpu7x:2x2x1
jax: 0.10.0
libtpu: 0.0.40
codegen_flags: <defaults>
</compile_context>

<pallas_src>
import functools

import jax
import jax.numpy as jnp
from jax import lax
from jax.experimental import pallas as pl
from jax.experimental.pallas import tpu as pltpu

_NEG_PAD = -1e9  # exp(pad - max) == 0.0 exactly in f32; keeps logprobs finite (no NaN)


def _confidence_masking_kernel(preds_ref, tgt_ref, out_ref, *, total_batch, tile_b):
    """Per-tile partial sums of cross-entropy and negative entropy.

    preds_ref : (TB, Cp) VMEM tile of logits (input dtype, cast to f32 here)
    tgt_ref   : (TB, 1)  VMEM tile of int32 class ids
    out_ref   : (8, 128) VMEM output slab; [0,0]=sum CE, [0,1]=sum(p*logp), rest 0
    """
    i = pl.program_id(0)

    logits = preds_ref[...].astype(jnp.float32)                 # (TB, Cp)
    tb, cp = logits.shape

    # numerically stable log-softmax
    m = jnp.max(logits, axis=-1, keepdims=True)                 # (TB, 1)  XLU
    shifted = logits - m
    expx = jnp.exp(shifted)                                     # EUP
    sumexp = jnp.sum(expx, axis=-1, keepdims=True)              # XLU lane reduce
    logprobs = shifted - jnp.log(sumexp)

    # cross-entropy rows via iota == target (no materialized one-hot)
    col = lax.broadcasted_iota(jnp.int32, (tb, cp), 1)
    onehot = col == tgt_ref[...]                                # (TB, Cp) bool
    ce_rows = -jnp.sum(jnp.where(onehot, logprobs, 0.0),
                       axis=-1, keepdims=True)                  # (TB, 1)

    # negative entropy rows: sum(p * logp) == sum(expx * logp) / sumexp
    # (exact divide; the approx EUP reciprocal was the source of the tolerance miss)
    ne_rows = jnp.sum(expx * logprobs, axis=-1, keepdims=True) / sumexp   # (TB, 1)

    # mask padded (ragged) rows out of the partial sums
    row = i * tile_b + lax.broadcasted_iota(jnp.int32, (tb, 1), 0)
    valid = (row < total_batch).astype(jnp.float32)             # (TB, 1)

    ce_sum = jnp.sum(ce_rows * valid)
    ne_sum = jnp.sum(ne_rows * valid)

    lane = lax.broadcasted_iota(jnp.int32, (8, 128), 1)
    sub = lax.broadcasted_iota(jnp.int32, (8, 128), 0)
    out_ref[...] = (jnp.where((sub == 0) & (lane == 0), ce_sum, 0.0)
                    + jnp.where((sub == 0) & (lane == 1), ne_sum, 0.0))


def _choose_tile_b(batch, c_pad):
    # Keep the per-tile f32 working set around <=2 MiB so the double-buffered input
    # plus in-kernel f32 temporaries stay well inside v7x's 32 MiB scoped VMEM default
    # (and far inside v5e/v6e).  Round to sublane multiples of 8.
    budget_bytes = 2 * 1024 * 1024
    rows = budget_bytes // (c_pad * 4)
    rows = max(8, min(rows, 1024))
    rows = (rows // 8) * 8
    rows = min(rows, ((batch + 7) // 8) * 8)   # don't pad tiny batches to a huge tile
    return max(8, rows)


def confidence_masking_loss(preds, target, *, alpha=0.1, tile_b=None):
    """preds: (B, C) float logits; target: (B,) integer class ids. Returns scalar f32."""
    B, C = preds.shape
    c_pad = ((C + 127) // 128) * 128
    if tile_b is None:
        tile_b = _choose_tile_b(B, c_pad)
    tile_b = max(8, (int(tile_b) // 8) * 8)
    b_pad = pl.cdiv(B, tile_b) * tile_b
    num_tiles = b_pad // tile_b

    # lane-dense class padding (-1e9 -> exp()==0, finite logprobs) + ragged-row padding
    preds_p = preds
    if c_pad != C:
        preds_p = jnp.concatenate(
            [preds_p, jnp.full((B, c_pad - C), _NEG_PAD, dtype=preds.dtype)], axis=1)
    if b_pad != B:
        preds_p = jnp.concatenate(
            [preds_p, jnp.zeros((b_pad - B, c_pad), dtype=preds.dtype)], axis=0)
    tgt_p = target.astype(jnp.int32).reshape(B, 1)
    if b_pad != B:
        tgt_p = jnp.concatenate([tgt_p, jnp.zeros((b_pad - B, 1), jnp.int32)], axis=0)

    kernel = functools.partial(_confidence_masking_kernel,
                               total_batch=B, tile_b=tile_b)

    itemsize = jnp.dtype(preds.dtype).itemsize
    cost = pl.CostEstimate(
        flops=8 * b_pad * c_pad,
        transcendentals=b_pad * c_pad + 2 * b_pad,
        bytes_accessed=b_pad * c_pad * itemsize + b_pad * 4 + num_tiles * 8 * 128 * 4,
    )

    partials = pl.pallas_call(
        kernel,
        out_shape=jax.ShapeDtypeStruct((num_tiles * 8, 128), jnp.float32),
        grid_spec=pltpu.PrefetchScalarGridSpec(
            num_scalar_prefetch=0,
            grid=(num_tiles,),
            in_specs=[
                pl.BlockSpec((tile_b, c_pad), lambda i: (i, 0)),
                pl.BlockSpec((tile_b, 1), lambda i: (i, 0)),
            ],
            out_specs=pl.BlockSpec((8, 128), lambda i: (i, 0)),
        ),
        compiler_params=pltpu.CompilerParams(
            dimension_semantics=("parallel",)),   # no carried state -> both TCs on v7x
        cost_estimate=cost,
    )(preds_p, tgt_p)

    # tiny final reduce + alpha combine in plain JAX (keeps the grid parallel)
    part = partials.reshape(num_tiles, 8, 128)
    ce_sum = jnp.sum(part[:, 0, 0])
    ne_sum = jnp.sum(part[:, 0, 1])
    inv_n = 1.0 / float(B)
    return ce_sum * inv_n + alpha * (ne_sum * inv_n)


def _reference(preds, target, alpha=0.1):
    x = preds.astype(jnp.float32)
    logprobs = jax.nn.log_softmax(x, axis=-1)
    probs = jax.nn.softmax(x, axis=-1)
    onehot = jax.nn.one_hot(target, preds.shape[-1], dtype=jnp.float32)
    ce = jnp.mean(-jnp.sum(onehot * logprobs, axis=-1))
    ent = jnp.mean(jnp.sum(probs * logprobs, axis=-1))
    return ce + alpha * ent


if __name__ == "__main__":
    key = jax.random.PRNGKey(0)
    k1, k2 = jax.random.split(key)

    # small demo shapes consistent with a classifier head
    B, C = 16, 32
    preds = jax.random.normal(k1, (B, C), dtype=jnp.float32)
    target = jax.random.randint(k2, (B,), 0, C, dtype=jnp.int32)

    out = confidence_masking_loss(preds, target, alpha=0.1)
    out = jax.block_until_ready(out)
    ref = _reference(preds, target, alpha=0.1)
    assert jnp.allclose(out, ref, atol=1e-5, rtol=1e-4), (out, ref)

    # also exercise the ragged / multi-tile / padded-class path
    B2, C2 = 37, 200
    preds2 = jax.random.normal(k1, (B2, C2), dtype=jnp.float32)
    target2 = jax.random.randint(k2, (B2,), 0, C2, dtype=jnp.int32)
    out2 = jax.block_until_ready(
        confidence_masking_loss(preds2, target2, alpha=0.1, tile_b=16))
    ref2 = _reference(preds2, target2, alpha=0.1)
    assert jnp.allclose(out2, ref2, atol=1e-5, rtol=1e-4), (out2, ref2)

    print("KERNEL_OK")
</pallas_src>

<mosaic_0001>
module attributes {stable_mosaic.version = 11 : i64} {
  func.func @_confidence_masking_kernel(%arg0: i32, %arg1: memref<16x128xf32, #tpu.memory_space<vmem>>, %arg2: memref<16x1xi32, #tpu.memory_space<vmem>>, %arg3: memref<8x128xf32, #tpu.memory_space<vmem>>) attributes {dimension_semantics = [#tpu.dimension_semantics<parallel>], iteration_bounds = array<i64: 1>, scalar_prefetch = 0 : i64, scratch_operands = 0 : i64, tpu.core_type = #tpu.core_type<tc>, window_params = [{transform_indices = @transform_0, window_bounds = array<i64: 16, 128>}, {transform_indices = @transform_1, window_bounds = array<i64: 16, 1>}, {transform_indices = @transform_2, window_bounds = array<i64: 8, 128>}]} {
    %c0 = arith.constant 0 : index
    %c0_0 = arith.constant 0 : index
    %0 = vector.load %arg1[%c0, %c0_0] : memref<16x128xf32, #tpu.memory_space<vmem>>, vector<16x128xf32>
    %cst = arith.constant dense<0xFF800000> : vector<16xf32>
    %1 = vector.multi_reduction <maximumf>, %0, %cst [1] : vector<16x128xf32> to vector<16xf32>
    %2 = vector.shape_cast %1 : vector<16xf32> to vector<16x1xf32>
    %3 = vector.broadcast %2 : vector<16x1xf32> to vector<16x128xf32>
    %4 = arith.subf %0, %3 : vector<16x128xf32>
    %5 = math.exp %4 : vector<16x128xf32>
    %cst_1 = arith.constant dense<0.000000e+00> : vector<16xf32>
    %6 = vector.multi_reduction <add>, %5, %cst_1 [1] : vector<16x128xf32> to vector<16xf32>
    %7 = vector.shape_cast %6 : vector<16xf32> to vector<16x1xf32>
    %8 = math.log %7 : vector<16x1xf32>
    %9 = vector.broadcast %8 : vector<16x1xf32> to vector<16x128xf32>
    %10 = arith.subf %4, %9 : vector<16x128xf32>
    %11 = tpu.iota {dimensions = array<i32: 1>} : vector<16x128xi32>
    %c0_2 = arith.constant 0 : index
    %c0_3 = arith.constant 0 : index
    %12 = vector.load %arg2[%c0_2, %c0_3] : memref<16x1xi32, #tpu.memory_space<vmem>>, vector<16x1xi32>
    %13 = vector.broadcast %12 : vector<16x1xi32> to vector<16x128xi32>
    %14 = arith.cmpi eq, %11, %13 : vector<16x128xi32>
    %cst_4 = arith.constant 0.000000e+00 : f32
    %15 = vector.broadcast %cst_4 : f32 to vector<16x128xf32>
    %16 = arith.select %14, %10, %15 : vector<16x128xi1>, vector<16x128xf32>
    %cst_5 = arith.constant dense<0.000000e+00> : vector<16xf32>
    %17 = vector.multi_reduction <add>, %16, %cst_5 [1] : vector<16x128xf32> to vector<16xf32>
    %18 = vector.shape_cast %17 : vector<16xf32> to vector<16x1xf32>
    %cst_6 = arith.constant 0.000000e+00 : f32
    %19 = vector.broadcast %cst_6 : f32 to vector<16x1xf32>
    %20 = arith.subf %19, %18 : vector<16x1xf32>
    %21 = arith.mulf %5, %10 : vector<16x128xf32>
    %cst_7 = arith.constant dense<0.000000e+00> : vector<16xf32>
    %22 = vector.multi_reduction <add>, %21, %cst_7 [1] : vector<16x128xf32> to vector<16xf32>
    %23 = vector.shape_cast %22 : vector<16xf32> to vector<16x1xf32>
    %24 = arith.divf %23, %7 : vector<16x1xf32>
    %c16_i32 = arith.constant 16 : i32
    %25 = arith.muli %arg0, %c16_i32 : i32
    %26 = tpu.iota {dimensions = array<i32: 0>} : vector<16x1xi32>
    %27 = vector.broadcast %25 : i32 to vector<16x1xi32>
    %28 = arith.addi %27, %26 : vector<16x1xi32>
    %c16_i32_8 = arith.constant 16 : i32
    %29 = vector.broadcast %c16_i32_8 : i32 to vector<16x1xi32>
    %30 = arith.cmpi slt, %28, %29 : vector<16x1xi32>
    %31 = arith.extui %30 : vector<16x1xi1> to vector<16x1xi32>
    %32 = arith.sitofp %31 : vector<16x1xi32> to vector<16x1xf32>
    %33 = arith.mulf %20, %32 : vector<16x1xf32>
    %34 = vector.shape_cast %33 : vector<16x1xf32> to vector<1x16x1xf32>
    %cst_9 = arith.constant dense<0.000000e+00> : vector<1xf32>
    %35 = vector.multi_reduction <add>, %34, %cst_9 [1, 2] : vector<1x16x1xf32> to vector<1xf32>
    %36 = vector.shape_cast %35 : vector<1xf32> to vector<1x1x1xf32>
    %37 = vector.extract %36[0, 0, 0] : f32 from vector<1x1x1xf32>
    %38 = arith.mulf %24, %32 : vector<16x1xf32>
    %39 = vector.shape_cast %38 : vector<16x1xf32> to vector<1x16x1xf32>
    %cst_10 = arith.constant dense<0.000000e+00> : vector<1xf32>
    %40 = vector.multi_reduction <add>, %39, %cst_10 [1, 2] : vector<1x16x1xf32> to vector<1xf32>
    %41 = vector.shape_cast %40 : vector<1xf32> to vector<1x1x1xf32>
    %42 = vector.extract %41[0, 0, 0] : f32 from vector<1x1x1xf32>
    %43 = tpu.iota {dimensions = array<i32: 1>} : vector<8x128xi32>
    %44 = tpu.iota {dimensions = array<i32: 0>} : vector<8x128xi32>
    %c0_i32 = arith.constant 0 : i32
    %45 = vector.broadcast %c0_i32 : i32 to vector<8x128xi32>
    %46 = arith.cmpi eq, %44, %45 : vector<8x128xi32>
    %c0_i32_11 = arith.constant 0 : i32
    %47 = vector.broadcast %c0_i32_11 : i32 to vector<8x128xi32>
    %48 = arith.cmpi eq, %43, %47 : vector<8x128xi32>
    %49 = arith.andi %46, %48 : vector<8x128xi1>
    %cst_12 = arith.constant 0.000000e+00 : f32
    %50 = vector.broadcast %37 : f32 to vector<8x128xf32>
    %51 = vector.broadcast %cst_12 : f32 to vector<8x128xf32>
    %52 = arith.select %49, %50, %51 : vector<8x128xi1>, vector<8x128xf32>
    %c0_i32_13 = arith.constant 0 : i32
    %53 = vector.broadcast %c0_i32_13 : i32 to vector<8x128xi32>
    %54 = arith.cmpi eq, %44, %53 : vector<8x128xi32>
    %c1_i32 = arith.constant 1 : i32
    %55 = vector.broadcast %c1_i32 : i32 to vector<8x128xi32>
    %56 = arith.cmpi eq, %43, %55 : vector<8x128xi32>
    %57 = arith.andi %54, %56 : vector<8x128xi1>
    %cst_14 = arith.constant 0.000000e+00 : f32
    %58 = vector.broadcast %42 : f32 to vector<8x128xf32>
    %59 = vector.broadcast %cst_14 : f32 to vector<8x128xf32>
    %60 = arith.select %57, %58, %59 : vector<8x128xi1>, vector<8x128xf32>
    %61 = arith.addf %52, %60 : vector<8x128xf32>
    %c0_15 = arith.constant 0 : index
    %c0_16 = arith.constant 0 : index
    %62 = vector.load %arg3[%c0_15, %c0_16] : memref<8x128xf32, #tpu.memory_space<vmem>>, vector<8x128xf32>
    tpu.vector_store %arg3[%c0_15, %c0_16], %61 {strides = array<i32>} : memref<8x128xf32, #tpu.memory_space<vmem>>, vector<8x128xf32>,
    return
  }
  func.func @transform_0(%arg0: i32) -> (i32, i32) {
    %c0_i32 = arith.constant 0 : i32
    %c0_i32_0 = arith.constant 0 : i32
    return %arg0, %c0_i32 : i32, i32
  }
  func.func @transform_1(%arg0: i32) -> (i32, i32) {
    %c0_i32 = arith.constant 0 : i32
    %c0_i32_0 = arith.constant 0 : i32
    return %arg0, %c0_i32 : i32, i32
  }
  func.func @transform_2(%arg0: i32) -> (i32, i32) {
    %c0_i32 = arith.constant 0 : i32
    %c0_i32_0 = arith.constant 0 : i32
    return %arg0, %c0_i32 : i32, i32
  }
}

</mosaic_0001>

<llo_original>
// kernel: tpu_custom_call.1
$region0: #{tpu_custom_call.1}
  #allocation0 [shape = 'u32[]', space=smem, size = 0x4, offset = 0x4, fixed_abs, tag = 'smem constant byte address 0x4 - core index']
  #allocation1 [shape = 'u32[144,128]{1,0:T(1,128)}', space=vmem, size = 0x12000, scoped, tag = 'internal scratch']
  %s0 = inlined_call_operand.vmem [shape: f32[16,128], index: 0, kind: input, shape index: {}]
  %s1 = inlined_call_operand.vmem [shape: s32[16,1], index: 1, kind: input, shape index: {}]
  %s2 = inlined_call_operand.hbm [shape: f32[8,128], index: 2, kind: output, shape index: {}]
  %s3 = sld [smem:[#allocation0]]
  $region18: #{tpu_custom_call.1} parent=0
    _
  %s5 = ssub.s32 1, %s3
  %s6 = scalar_select 0, %s5, %s3
  $region1: #{tpu_custom_call.1} parent=0
    #allocation2 [shape = 'u8[4096]{0}', space=vmem, size = 0x1000, scoped, tag = 'output window, operand 0, single buffered']
    #allocation3 [shape = 's32[1]{0}', space=sflag, size = 0x4, scoped, tag = 'scoped memory for tpu_custom_call.1']
    %7 = vsyncpa [#allocation3], 0
    // Predicated region
    $region2: #{tpu_custom_call.1} parent=1 // pred_check
      _
    $region3: #{tpu_custom_call.1} parent=1 // pred_check_branch
      %9 = sbr.rel (0) target = $region5
    $region4: #{tpu_custom_call.1} parent=1 // pred_region
      _
    $region5: #{tpu_custom_call.1} parent=1 // pred_fallthru
      _
    // Predicated region
    $region6: #{tpu_custom_call.1} parent=1 // pred_check
      _
    $region7: #{tpu_custom_call.1} parent=1 // pred_check_branch
      %11 = sbr.rel (0) target = $region9
    $region8: #{tpu_custom_call.1} parent=1 // pred_region
      _
    $region9: #{tpu_custom_call.1} parent=1 // pred_fallthru
      _
    %v12 = vld [vmem:[%s0] sm:$0xff]
    %v13 = vld [vmem:[%s0 + $0x8] sm:$0xff]
    %14 = vmax.xlane.f32.xlu0 %v12
    %v15 = vpop.xlane.xlu0 %14
    %16 = vmax.xlane.f32.xlu0 %v13
    %v17 = vpop.xlane.xlu0 %16
    %v18 = vsub.f32 %v12, %v15
    %v19 = vsub.f32 %v13, %v17
    %v20 = vmul.f32 %v18, 1.442695
    %v21 = vpow.pop %v20
    %v22 = vmul.f32 %v19, 1.442695
    %v23 = vpow.pop %v22
    %24 = vadd.xlane.f32.xlu0 %v21
    %v25 = vpop.xlane.xlu0 %24
    %26 = vadd.xlane.f32.xlu0 %v23
    %v27 = vpop.xlane.xlu0 %26
    %v28 = vlog2.pop %v25
    %v29 = vmul.f32 %v28, 0.6931472
    %v30 = vlog2.pop %v27
    %v31 = vmul.f32 %v30, 0.6931472
    %v32 = vsub.f32 %v18, %v29
    %v33 = vsub.f32 %v19, %v31
    %v34 = vlaneseq
    %v35 = vand.u32 %v34, 127
    %v36 = vld [vmem:[%s1] sm:$0xff]
    %v37 = vld [vmem:[%s1 + $0x8] sm:$0xff]
    %38 = vset.pattern.permute.xlu0 0
    %39 = vperm.xlu0 %38, %v36
    %v40 = vpop.permute.xlu0 %39
    %41 = vset.pattern.permute.xlu0 0
    %42 = vperm.xlu0 %41, %v37
    %v43 = vpop.permute.xlu0 %42
    %vm44 = vcmp.eq.s32.totalorder %v35, %v40
    %vm45 = vcmp.eq.s32.totalorder %v35, %v43
    %v46 = vsel %vm44, %v32, 0.0
    %v47 = vsel %vm45, %v33, 0.0
    %48 = vadd.xlane.f32.xlu0 %v46
    %v49 = vpop.xlane.xlu0 %48
    %50 = vadd.xlane.f32.xlu0 %v47
    %v51 = vpop.xlane.xlu0 %50
    %v52 = vsub.f32 0.0, %v49
    %v53 = vsub.f32 0.0, %v51
    %v54 = vmul.f32 %v21, %v32
    %v55 = vmul.f32 %v23, %v33
    %56 = vadd.xlane.f32.xlu0 %v54
    %v57 = vpop.xlane.xlu0 %56
    %58 = vadd.xlane.f32.xlu0 %v55
    %v59 = vpop.xlane.xlu0 %58
    %v60 = vrcp.pop %v25
    %v61 = vmul.f32 %v57, %v60
    %v62 = vrcp.pop %v27
    %v63 = vmul.f32 %v59, %v62
    %s64 = smul.u32 0, 16
    %v65 = vlaneseq
    %v66 = vshrl.u32 %v65, 7
    %v67 = vadd.s32 %v66, 8
    %v68 = vstv %s64
    %v69 = vadd.s32 %v68, %v66
    %v70 = vadd.s32 %v68, %v67
    %vm71 = vcmp.lt.s32.totalorder %v69, 16
    %vm72 = vcmp.lt.s32.totalorder %v70, 16
    %v73 = vsel %vm71, 1, 0
    %v74 = vsel %vm72, 1, 0
    %v75 = vcvt.s32.f32 %v73
    %v76 = vcvt.s32.f32 %v74
    %v77 = vmul.f32 %v52, %v75
    %v78 = vmul.f32 %v53, %v76
    %vm79 = vcmask 7168
    %v80 = vsel %vm79, %v77, 0.0
    %v81 = vsel %vm79, %v78, 0.0
    %v82 = vadd.f32 %v80, %v81
    %83 = vadd.xlane.f32.xlu0 %v82
    %v84 = vpop.xlane.xlu0 %83
    %v85 = vrot.slane %v84, 4
    %v86 = vadd.f32 %v84, %v85
    %v87 = vrot.slane %v86, 2
    %v88 = vadd.f32 %v86, %v87
    %v89 = vrot.slane %v88, 1
    %v90 = vadd.f32 %v88, %v89
    %s91 = vtos %v90
    %v92 = vmul.f32 %v61, %v75
    %v93 = vmul.f32 %v63, %v76
    %v94 = vsel %vm79, %v92, 0.0
    %v95 = vsel %vm79, %v93, 0.0
    %v96 = vadd.f32 %v94, %v95
    %97 = vadd.xlane.f32.xlu0 %v96
    %v98 = vpop.xlane.xlu0 %97
    %v99 = vrot.slane %v98, 4
    %v100 = vadd.f32 %v98, %v99
    %v101 = vrot.slane %v100, 2
    %v102 = vadd.f32 %v100, %v101
    %v103 = vrot.slane %v102, 1
    %v104 = vadd.f32 %v102, %v103
    %s105 = vtos %v104
    %vm106 = vcmp.eq.s32.totalorder %v66, 0
    %vm107 = vcmp.eq.s32.totalorder %v35, 0
    %vm108 = vmand %vm106, %vm107
    %v109 = vstv %s91
    %v110 = vsel %vm108, %v109, 0.0
    %vm111 = vcmp.eq.s32.totalorder %v35, 1
    %vm112 = vmand %vm106, %vm111
    %v113 = vstv %s105
    %v114 = vsel %vm112, %v113, 0.0
    %v115 = vadd.f32 %v110, %v114
    %116 = vst [vmem:[#allocation2] sm:$0xff] %v115
    // Predicated region
    $region10: #{tpu_custom_call.1} parent=1 // pred_check
      _
    $region11: #{tpu_custom_call.1} parent=1 // pred_check_branch
      %118 = sbr.rel (0) target = $region13
    $region12: #{tpu_custom_call.1} parent=1 // pred_region
      %s120 = ssub.s32 128, 128
      %121 = vsyncadd [#allocation3], %s120
      %s123 = sshll.u32 [#allocation2], 4
      %s124 = int_to_ptr.vmem [resolvable:$true] %s123
      %126 = dma.vmem_to_hbm [thread:$0]  %s124, 128, %s2, [#allocation3]
    $region13: #{tpu_custom_call.1} parent=1 // pred_fallthru
      _
    // Predicated region
    $region14: #{tpu_custom_call.1} parent=1 // pred_check
      _
    $region15: #{tpu_custom_call.1} parent=1 // pred_check_branch
      %128 = sbr.rel (0) target = $region17
    $region16: #{tpu_custom_call.1} parent=1 // pred_region
      %129 = dma.done [#allocation3], 128
    $region17: #{tpu_custom_call.1} parent=1 // pred_fallthru
      _
    %130 = vsyncpa [#allocation3], 1

</llo_original>
